<compile_context>
chip_gen: v6e
topology: v6e:2x2x1
jax: 0.10.0
libtpu: 0.0.40
codegen_flags: <defaults>
</compile_context>

<pallas_src>
import numpy as np
import jax
import jax.numpy as jnp
from jax.experimental import pallas as pl
from jax.experimental.pallas import tpu as pltpu


# ---------------------------------------------------------------------------
# Deterministic parameter construction (mirrors DummyFilteringModel.__init__)
# ---------------------------------------------------------------------------

def hann_periodic(n):
    if n <= 0:
        return np.zeros(0, dtype=np.float64)
    k = np.arange(n, dtype=np.float64)
    return 0.5 * (1.0 - np.cos(2.0 * np.pi * k / n))


def asymmetric_hann_window_pair(analysis_winlen, synthesis_winlen):
    fade_in_len = analysis_winlen - synthesis_winlen // 2
    analysis = np.concatenate([
        hann_periodic(2 * fade_in_len)[:fade_in_len],
        hann_periodic(synthesis_winlen)[synthesis_winlen // 2:],
    ]) ** 0.5
    synthesis = hann_periodic(synthesis_winlen) / np.clip(
        analysis[len(analysis) - synthesis_winlen:], 1e-12, None)
    return analysis, synthesis


def build_params(winlen, hopsize):
    """Forward/inverse transforms + one-hot filter + folded (W, 2H) matrix (float64)."""
    W, H = winlen, hopsize
    F = W // 2 + 1
    analysis, synthesis = asymmetric_hann_window_pair(W, 2 * H)

    # forward_transform: conv1d weight (2F, 1, W); spectrum = frame @ [fwd_r | fwd_i].
    stft = np.fft.rfft(np.eye(W)) * analysis[:, None]                  # (W, F) complex
    scale = 1.0 / np.sqrt(W)
    fwd_r = np.asarray(scale * stft.real, dtype=np.float32)            # (W, F)
    fwd_i = np.asarray(scale * stft.imag, dtype=np.float32)            # (W, F)

    # inverse_transform: conv_transpose1d weight (2F, 1, 2H);
    # per-frame output = y_real @ inv_r + y_imag @ inv_i.
    istft_r = np.fft.irfft(np.eye(F), n=W)                             # (F, W)
    istft_i = np.fft.irfft(1j * np.eye(F), n=W)                        # (F, W)
    inv_r = np.asarray(np.sqrt(W) * istft_r[:, -2 * H:] * synthesis[None, :],
                       dtype=np.float32)                               # (F, 2H)
    inv_i = np.asarray(np.sqrt(W) * istft_i[:, -2 * H:] * synthesis[None, :],
                       dtype=np.float32)                               # (F, 2H)

    # one_hot_filter (2, 1, F): real channel has a 1 at bin W//4, imag channel is zero.
    filt_r = np.zeros((1, F), dtype=np.float32)
    filt_r[0, W // 4] = 1.0
    filt_i = np.zeros((1, F), dtype=np.float32)

    # Fold the (input-independent) complex filter into a single (W, 2H) matrix so the
    # analysis -> filter -> synthesis chain per frame is one matmul:
    #   out_frame = frame @ comb
    # NOTE: this fold is only valid because the one-hot filter is input-independent.
    fr = filt_r[0].astype(np.float64)
    fi = filt_i[0].astype(np.float64)
    fwd_r64, fwd_i64 = fwd_r.astype(np.float64), fwd_i.astype(np.float64)
    inv_r64, inv_i64 = inv_r.astype(np.float64), inv_i.astype(np.float64)
    comb64 = ((fwd_r64 * fr[None, :] - fwd_i64 * fi[None, :]) @ inv_r64
              + (fwd_r64 * fi[None, :] + fwd_i64 * fr[None, :]) @ inv_i64)  # (W, 2H) f64

    return dict(fwd_r=fwd_r, fwd_i=fwd_i, inv_r=inv_r, inv_i=inv_i,
                filt_r=filt_r, filt_i=filt_i, comb64=comb64)


# ---------------------------------------------------------------------------
# Pallas kernel: single fused super-frame matmul
# (analysis + filter + synthesis + intra-group overlap-add all folded into comb_super)
# ---------------------------------------------------------------------------

def _superframe_matmul_kernel(frames_ref, comb_ref, out_ref):
    # (tm, K) bf16 @ (K, N) bf16 -> (tm, N), f32 MXU accumulation, bf16 store.
    out_ref[...] = jnp.dot(frames_ref[...], comb_ref[...],
                           preferred_element_type=jnp.float32).astype(out_ref.dtype)


def _round_up(x, m):
    return ((x + m - 1) // m) * m


def _choose_tm(R):
    # >= 16 rows (bf16 sublane packing), <= 1024 rows; aim for >= 8 grid steps only
    # when there is enough work (keeps v7x's two cores pipelined without shrinking
    # tiles below a useful size on v5e/v6e).
    tm = _round_up(max(16, -(-R // 8)), 16)
    return min(1024, tm)


def _run_kernel(frames_2d, comb_np, out_dtype=jnp.bfloat16):
    """frames_2d: (R, K) bf16;  comb_np: (K, N) numpy float;  returns (R, N) out_dtype."""
    R, K = frames_2d.shape
    N = comb_np.shape[1]
    tm = _choose_tm(R)
    Rp = _round_up(R, tm)
    if Rp != R:
        frames_2d = jnp.pad(frames_2d, ((0, Rp - R), (0, 0)))
    comb = jnp.asarray(np.asarray(comb_np, dtype=np.float32)).astype(jnp.bfloat16)

    out = pl.pallas_call(
        _superframe_matmul_kernel,
        out_shape=jax.ShapeDtypeStruct((Rp, N), out_dtype),
        grid=(Rp // tm,),
        in_specs=[
            pl.BlockSpec((tm, K), lambda i: (i, 0)),    # super-frame row tile
            pl.BlockSpec((K, N), lambda i: (0, 0)),     # banded weights (VMEM resident)
        ],
        out_specs=pl.BlockSpec((tm, N), lambda i: (i, 0)),
        compiler_params=pltpu.CompilerParams(
            dimension_semantics=("parallel",)),
    )(frames_2d, comb)
    return out[:R]


# ---------------------------------------------------------------------------
# Forward pass wrapper
# ---------------------------------------------------------------------------

def dummy_filtering_forward(x_in, params, winlen, hopsize, group_frames=None):
    """Equivalent of DummyFilteringModel(method='complex_filter').forward(x_in)."""
    B, xlen = x_in.shape
    W, H = winlen, hopsize
    assert xlen >= W, "input must be at least one window long"
    T = (xlen - W) // H + 1

    # Number of frames folded per super-frame: default so the output width is 128 lanes.
    if group_frames is None:
        G = max(1, 128 // H - 1) if H <= 128 else 1
    else:
        G = max(1, int(group_frames))
    GH = G * H
    K = W + (G - 1) * H            # super-frame (input) length
    N = (G + 1) * H                # super-frame (output) length

    n_full = T // G                # number of full groups of G frames
    r = T - n_full * G             # leftover frames in the last (partial) group
    n_super = n_full + (1 if r > 0 else 0)

    # Banded super-frame matrices, accumulated in float64 then cast once.
    comb64 = params["comb64"]      # (W, 2H)

    def banded(num_frames):
        m = np.zeros((K, N), dtype=np.float64)
        for j in range(num_frames):
            m[j * H:j * H + W, j * H:j * H + 2 * H] += comb64
        return m

    # Cast audio to bf16 BEFORE framing (halves framing bytes).
    x_bf = x_in.astype(jnp.bfloat16)

    outs = []
    if n_full > 0:
        # Super-frame g = x[g*GH : g*GH + K]; built as contiguous reshape + lookahead
        # concat (no gather):  [x[g*GH : (g+1)*GH] | x[(g+1)*GH : (g+1)*GH + (W-H)]].
        main_part = x_bf[:, :n_full * GH].reshape(B, n_full, GH)
        if W > H:
            need = (n_full + 1) * GH
            xp = x_bf if need <= xlen else jnp.pad(x_bf, ((0, 0), (0, need - xlen)))
            look = xp[:, GH:need].reshape(B, n_full, GH)[:, :, :W - H]
            frames_full = jnp.concatenate([main_part, look], axis=-1)
        else:
            frames_full = main_part
        frames_full = frames_full.reshape(B * n_full, K)               # (B*n_full, K)
        o = _run_kernel(frames_full, banded(G))                        # (B*n_full, N)
        outs.append(o.reshape(B, n_full, N))

    if r > 0:
        # Partial group: same K-length super-frame but only the first r bands are
        # active, so frames beyond T contribute exactly zero (they cannot be masked at
        # the input because frames overlap).
        start = n_full * GH
        need = start + K
        xp = x_bf if need <= xlen else jnp.pad(x_bf, ((0, 0), (0, need - xlen)))
        frames_part = xp[:, start:start + K]                           # (B, K) slice
        o = _run_kernel(frames_part, banded(r))                        # (B, N)
        outs.append(o.reshape(B, 1, N))

    super_out = outs[0] if len(outs) == 1 else jnp.concatenate(outs, axis=1)
    super_out = super_out.astype(jnp.float32)                          # (B, n_super, N)

    # Inter-super overlap-add: super g covers output [g*GH, g*GH + N), stride GH,
    # so only the last H samples overlap the next super's first H samples.
    main = super_out[:, :, :GH].reshape(B, n_super * GH)
    tail = super_out[:, :, GH:]                                        # (B, n_super, H)
    y1 = jnp.concatenate([main, jnp.zeros((B, H), jnp.float32)], axis=-1)
    tail_f = jnp.pad(tail, ((0, 0), (0, 0), (0, GH - H))).reshape(B, n_super * GH)
    y2 = jnp.concatenate([jnp.zeros((B, GH), jnp.float32), tail_f],
                         axis=-1)[:, :n_super * GH + H]
    y = (y1 + y2)[:, :(T + 1) * H]                                     # exact OLA length

    # Left pad by winlen - 2*hopsize, then trim / right-pad to xlen.
    y = jnp.pad(y, ((0, 0), (W - 2 * H, 0)))
    ylen = y.shape[-1]
    if ylen > xlen:
        y = y[:, :xlen]
    elif ylen < xlen:
        y = jnp.pad(y, ((0, 0), (0, xlen - ylen)))
    return y


# ---------------------------------------------------------------------------
# Pure NumPy reference (explicit conv1d / filter / conv_transpose1d loops)
# ---------------------------------------------------------------------------

def numpy_reference(x_in, params, winlen, hopsize):
    x = np.asarray(x_in, dtype=np.float64)
    B, xlen = x.shape
    W, H = winlen, hopsize
    T = (xlen - W) // H + 1
    fwd_r, fwd_i = params["fwd_r"], params["fwd_i"]
    inv_r, inv_i = params["inv_r"], params["inv_i"]
    filt_r, filt_i = params["filt_r"][0], params["filt_i"][0]

    out = np.zeros((B, (T - 1) * H + 2 * H), dtype=np.float64)
    for b in range(B):
        for t in range(T):
            frame = x[b, t * H:t * H + W]
            xr = frame @ fwd_r
            xi = frame @ fwd_i
            yr = xr * filt_r - xi * filt_i
            yi = xr * filt_i + xi * filt_r
            out[b, t * H:t * H + 2 * H] += yr @ inv_r + yi @ inv_i
    out = np.pad(out, ((0, 0), (W - 2 * H, 0)))
    ylen = out.shape[-1]
    if ylen > xlen:
        out = out[:, :xlen]
    elif ylen < xlen:
        out = np.pad(out, ((0, 0), (0, xlen - ylen)))
    return out.astype(np.float32)


# ---------------------------------------------------------------------------

if __name__ == "__main__":
    winlen, hopsize = 32, 8
    params = build_params(winlen, hopsize)

    key = jax.random.PRNGKey(0)
    # Two small configs: the second exercises multiple grid steps, several full
    # super-frame groups AND the partial-group path.
    configs = [(2, 128), (3, 2048)]

    for (B, L) in configs:
        key, sub = jax.random.split(key)
        x_in = jax.random.normal(sub, (B, L), dtype=jnp.float32)

        fwd = jax.jit(lambda x: dummy_filtering_forward(x, params, winlen, hopsize))
        y = jax.block_until_ready(fwd(x_in))
        assert y.shape == (B, L), f"unexpected output shape {y.shape} for (B={B}, L={L})"

        y_ref = numpy_reference(np.asarray(x_in), params, winlen, hopsize)
        y_np = np.asarray(y, dtype=np.float32)
        # Tolerance sized for bf16 inputs/weights/outputs (f32 MXU accumulation).
        if not np.allclose(y_np, y_ref, atol=3e-2, rtol=2e-2):
            raise AssertionError(
                f"mismatch vs reference (B={B}, L={L}): "
                f"max abs err = {np.max(np.abs(y_np - y_ref))}")

    print("KERNEL_OK")
</pallas_src>

<mosaic_0001>
module attributes {stable_mosaic.version = 11 : i64} {
  func.func @_superframe_matmul_kernel(%arg0: i32, %arg1: memref<16x144xbf16, #tpu.memory_space<vmem>>, %arg2: memref<144x128xbf16, #tpu.memory_space<vmem>>, %arg3: memref<16x128xbf16, #tpu.memory_space<vmem>>) attributes {dimension_semantics = [#tpu.dimension_semantics<parallel>], iteration_bounds = array<i64: 1>, scalar_prefetch = 0 : i64, scratch_operands = 0 : i64, tpu.core_type = #tpu.core_type<tc>, window_params = [{transform_indices = @transform_0, window_bounds = array<i64: 16, 144>}, {pipeline_mode = #tpu.pipeline_mode<synchronous>, transform_indices = @transform_1, window_bounds = array<i64: 144, 128>}, {transform_indices = @transform_2, window_bounds = array<i64: 16, 128>}]} {
    %c0 = arith.constant 0 : index
    %c0_0 = arith.constant 0 : index
    %0 = vector.load %arg1[%c0, %c0_0] : memref<16x144xbf16, #tpu.memory_space<vmem>>, vector<16x144xbf16>
    %c0_1 = arith.constant 0 : index
    %c0_2 = arith.constant 0 : index
    %1 = vector.load %arg2[%c0_1, %c0_2] : memref<144x128xbf16, #tpu.memory_space<vmem>>, vector<144x128xbf16>
    %cst = arith.constant dense<0.000000e+00> : vector<16x128xf32>
    %2 = tpu.matmul %0, %1, %cst {dimension_numbers = #tpu.dot_dimension_numbers<[1], [0], [0], [1], [0, 0, 1, 1], [], []>} : vector<16x144xbf16>, vector<144x128xbf16>, vector<16x128xf32> -> vector<16x128xf32>
    %3 = arith.truncf %2 : vector<16x128xf32> to vector<16x128xbf16>
    %c0_3 = arith.constant 0 : index
    %c0_4 = arith.constant 0 : index
    %4 = vector.load %arg3[%c0_3, %c0_4] : memref<16x128xbf16, #tpu.memory_space<vmem>>, vector<16x128xbf16>
    tpu.vector_store %arg3[%c0_3, %c0_4], %3 {strides = array<i32>} : memref<16x128xbf16, #tpu.memory_space<vmem>>, vector<16x128xbf16>,
    return
  }
  func.func @transform_0(%arg0: i32) -> (i32, i32) {
    %c0_i32 = arith.constant 0 : i32
    %c0_i32_0 = arith.constant 0 : i32
    return %arg0, %c0_i32 : i32, i32
  }
  func.func @transform_1(%arg0: i32) -> (i32, i32) {
    %c0_i32 = arith.constant 0 : i32
    %c0_i32_0 = arith.constant 0 : i32
    %c0_i32_1 = arith.constant 0 : i32
    return %c0_i32, %c0_i32_0 : i32, i32
  }
  func.func @transform_2(%arg0: i32) -> (i32, i32) {
    %c0_i32 = arith.constant 0 : i32
    %c0_i32_0 = arith.constant 0 : i32
    return %arg0, %c0_i32 : i32, i32
  }
}

</mosaic_0001>

<llo_original>
// kernel: _lambda_.1
$region0: #{_lambda_.1}
  #allocation0 [shape = 'u32[]', space=smem, size = 0x4, offset = 0x4, fixed_abs, tag = 'smem constant byte address 0x4 - core index']
  #allocation1 [shape = 'u32[144,128]{1,0:T(1,128)}', space=vmem, size = 0x12000, scoped, tag = 'internal scratch']
  %s0 = inlined_call_operand.vmem [shape: bf16[16,144], index: 0, kind: input, shape index: {}]
  %s1 = inlined_call_operand.hbm [shape: bf16[144,128], index: 1, kind: input, shape index: {}]
  %s2 = inlined_call_operand.vmem [shape: bf16[16,128], index: 2, kind: output, shape index: {}]
  %s3 = sld [smem:[#allocation0]]
  $region22: #{_lambda_.1} parent=0
    _
  %s5 = ssub.s32 1, %s3
  %s6 = scalar_select 0, %s5, %s3
  $region1: #{_lambda_.1} parent=0
    #allocation2 [shape = 'u8[36864]{0}', space=vmem, size = 0x9000, scoped, tag = 'input window, operand 1, single buffered']
    #allocation3 [shape = 's32[1]{0}', space=sflag, size = 0x4, scoped, tag = 'scoped memory for _lambda_.1']
    %7 = vsyncpa [#allocation3], 0
    // Predicated region
    $region2: #{_lambda_.1} parent=1 // pred_check
      _
    $region3: #{_lambda_.1} parent=1 // pred_check_branch
      %9 = sbr.rel (0) target = $region5
    $region4: #{_lambda_.1} parent=1 // pred_region
      _
    $region5: #{_lambda_.1} parent=1 // pred_fallthru
      _
    // Predicated region
    $region6: #{_lambda_.1} parent=1 // pred_check
      _
    $region7: #{_lambda_.1} parent=1 // pred_check_branch
      %11 = sbr.rel (0) target = $region9
    $region8: #{_lambda_.1} parent=1 // pred_region
      %s13 = ssub.s32 1152, 1152
      %14 = vsyncadd [#allocation3], %s13
      %s15 = sshll.u32 [#allocation2], 4
      %s16 = int_to_ptr.vmem [resolvable:$true] %s15
      %21 = dma.hbm_to_vmem [thread:$0]  %s1, 1152, %s16, [#allocation3], 64, 64, 4
    $region9: #{_lambda_.1} parent=1 // pred_fallthru
      _
    // Predicated region
    $region10: #{_lambda_.1} parent=1 // pred_check
      _
    $region11: #{_lambda_.1} parent=1 // pred_check_branch
      %23 = sbr.rel (0) target = $region13
    $region12: #{_lambda_.1} parent=1 // pred_region
      %24 = dma.done [#allocation3], 1152
    $region13: #{_lambda_.1} parent=1 // pred_fallthru
      _
    %v26 = vld [vmem:[%s0] sm:$0xff]
    %v27 = vld [vmem:[%s0 + $0x8] sm:$0xff]
    %v28 = vld [vmem:[#allocation2] sm:$0xf]
    %v29 = vld [vmem:[#allocation2 + $0x4] sm:$0xf]
    %v30 = vld [vmem:[#allocation2 + $0x8] sm:$0xf]
    %v31 = vld [vmem:[#allocation2 + $0xc] sm:$0xf]
    %v32 = vld [vmem:[#allocation2 + $0x10] sm:$0xf]
    %v33 = vld [vmem:[#allocation2 + $0x14] sm:$0xf]
    %v34 = vld [vmem:[#allocation2 + $0x18] sm:$0xf]
    %v35 = vld [vmem:[#allocation2 + $0x1c] sm:$0xf]
    %v36 = vld [vmem:[#allocation2 + $0x20] sm:$0xf]
    %v37 = vld [vmem:[#allocation2 + $0x24] sm:$0xf]
    %v38 = vld [vmem:[#allocation2 + $0x28] sm:$0xf]
    %v39 = vld [vmem:[#allocation2 + $0x2c] sm:$0xf]
    %v40 = vld [vmem:[#allocation2 + $0x30] sm:$0xf]
    %v41 = vld [vmem:[#allocation2 + $0x34] sm:$0xf]
    %v42 = vld [vmem:[#allocation2 + $0x38] sm:$0xf]
    %v43 = vld [vmem:[#allocation2 + $0x3c] sm:$0xf]
    %v44 = vld [vmem:[#allocation2 + $0x40] sm:$0xf]
    %v45 = vld [vmem:[#allocation2 + $0x44] sm:$0xf]
    %v48 = vunpack.c.l.b16 %v26
    %v49 = vunpack.c.h.b16 %v26
    %v50 = vunpack.c.l.b16 %v27
    %v51 = vunpack.c.h.b16 %v27
    %v52 = vpack.c.b16 %v50, %v48
    %v53 = vpack.c.b16 %v51, %v49
    %v73 = vunpack.c.l.b16 %v28
    %v74 = vunpack.c.l.b16 %v29
    %v75 = vunpack.c.l.b16 %v30
    %v76 = vunpack.c.l.b16 %v31
    %v77 = vunpack.c.l.b16 %v32
    %v78 = vunpack.c.l.b16 %v33
    %v79 = vunpack.c.l.b16 %v34
    %v80 = vunpack.c.l.b16 %v35
    %v81 = vunpack.c.l.b16 %v36
    %v82 = vunpack.c.l.b16 %v37
    %v83 = vunpack.c.l.b16 %v38
    %v84 = vunpack.c.l.b16 %v39
    %v85 = vunpack.c.l.b16 %v40
    %v86 = vunpack.c.l.b16 %v41
    %v87 = vunpack.c.l.b16 %v42
    %v88 = vunpack.c.l.b16 %v43
    %v89 = vunpack.c.l.b16 %v44
    %v90 = vunpack.c.l.b16 %v45
    %v91 = vpack.c.b16 %v74, %v73
    %v92 = vpack.c.b16 %v76, %v75
    %v93 = vpack.c.b16 %v78, %v77
    %v94 = vpack.c.b16 %v80, %v79
    %v95 = vpack.c.b16 %v82, %v81
    %v96 = vpack.c.b16 %v84, %v83
    %v97 = vpack.c.b16 %v86, %v85
    %v98 = vpack.c.b16 %v88, %v87
    %v99 = vpack.c.b16 %v90, %v89
    %vm109 = vcmask 130048
    %v111 = vsel %vm109, %v53, 0
    %113 = vmatprep.subr.bf16.mxu0 0
    %114 = vmatpush1.bf16.msra.mxu0 %v98
    %115 = vmatprep.subr.bf16.mxu0 0
    %116 = vmatpush1.bf16.msra.mxu0 %v97
    %117 = vmatprep.subr.bf16.mxu0 0
    %118 = vmatpush1.bf16.msra.mxu0 %v96
    %119 = vmatprep.subr.bf16.mxu0 0
    %120 = vmatpush1.bf16.msra.mxu0 %v95
    %121 = vmatprep.subr.bf16.mxu0 0
    %122 = vmatpush1.bf16.msra.mxu0 %v94
    %123 = vmatprep.subr.bf16.mxu0 0
    %124 = vmatpush1.bf16.msra.mxu0 %v93
    %125 = vmatprep.subr.bf16.mxu0 0
    %126 = vmatpush1.bf16.msra.mxu0 %v92
    %127 = vmatprep.subr.bf16.mxu0 0
    %128 = vmatpush1.bf16.msra.mxu0 %v91
    %129 = vmatprep.subr.bf16.mxu0 0
    %130 = vmatpush2.bf16.msra.mxu0 0
    %131 = vmatprep.subr.bf16.mxu0 0
    %132 = vmatpush2.bf16.msra.mxu0 0
    %133 = vmatprep.subr.bf16.mxu0 0
    %134 = vmatpush2.bf16.msra.mxu0 0
    %135 = vmatprep.subr.bf16.mxu0 0
    %136 = vmatpush2.bf16.msra.mxu0 0
    %137 = vmatprep.subr.bf16.mxu0 0
    %138 = vmatpush2.bf16.msra.mxu0 0
    %139 = vmatprep.subr.bf16.mxu0 0
    %140 = vmatpush2.bf16.msra.mxu0 0
    %141 = vmatprep.subr.bf16.mxu0 0
    %142 = vmatpush2.bf16.msra.mxu0 0
    %143 = vmatprep.subr.bf16.mxu0 0
    %144 = vmatpush2.bf16.msra.mxu0 %v99
    %145 = vmatprep.mubr.bf16.mxu0 %v111
    %146 = vmatmul.mubr.bf16.gmra.mxu0 %v52
    %v147 = vpop.f32.mrf.mxu0
    %v148 = vadd.f32 0.0, %v147
    %v149 = vpop.f32.mrf.mxu0
    %v150 = vpop.f32.mrf.mxu0
    %v151 = vadd.f32 0.0, %v150
    %v152 = vpop.f32.mrf.mxu0
    %153 = vdwg.mxu0
    %v154 = vpack.c.bf16 %v151, %v148
    %v156 = vunpack.c.l.b16 %v154
    %v157 = vunpack.c.h.b16 %v154
    %v158 = vpack.c.b16 %v156, %v156
    %v159 = vpack.c.b16 %v157, %v157
    %162 = vst [vmem:[%s2] sm:$0xf] %v158
    %163 = vst [vmem:[%s2 + $0x4] sm:$0xf] %v159
    // Predicated region
    $region14: #{_lambda_.1} parent=1 // pred_check
      _
    $region15: #{_lambda_.1} parent=1 // pred_check_branch
      %165 = sbr.rel (0) target = $region17
    $region16: #{_lambda_.1} parent=1 // pred_region
      _
    $region17: #{_lambda_.1} parent=1 // pred_fallthru
      _
    // Predicated region
    $region18: #{_lambda_.1} parent=1 // pred_check
      _
    $region19: #{_lambda_.1} parent=1 // pred_check_branch
      %167 = sbr.rel (0) target = $region21
    $region20: #{_lambda_.1} parent=1 // pred_region
      _
    $region21: #{_lambda_.1} parent=1 // pred_fallthru
      _
    %168 = vsyncpa [#allocation3], 1

</llo_original>
